<compile_context>
chip_gen: v6e
topology: v6e:2x2x1
jax: 0.10.0
libtpu: 0.0.40
codegen_flags: <defaults>
</compile_context>

<pallas_src>
import jax
import jax.numpy as jnp
from jax.experimental import pallas as pl
from jax.experimental.pallas import tpu as pltpu

BN_EPS = 1e-5               # nn.BatchNorm1d default eps
SOFTPLUS_THRESHOLD = 20.0   # nn.Softplus default threshold (beta=1)


def _make_fused_kernel(num_linear):
    """Build a kernel that runs all `num_linear` layers of the DNN in one body.

    Kernel signature: kernel(x_ref, w0_ref, b0_ref, w1_ref, b1_ref, ..., o_ref)
    where wi is pre-transposed to (in_features, out_features) and bi is (1, out_features).
    """

    def kernel(*refs):
        x_ref = refs[0]
        o_ref = refs[-1]
        param_refs = refs[1:-1]

        x = x_ref[...].astype(jnp.float32)

        # Hidden layers: Linear -> tanh -> BatchNorm1d(train, gamma=1, beta=0) -> Dropout(p=0)
        for li in range(num_linear - 1):
            w = param_refs[2 * li][...]
            b = param_refs[2 * li + 1][...]
            y = jnp.dot(x, w, preferred_element_type=jnp.float32) + b   # Linear (MXU)
            y = jnp.tanh(y)                                             # Tanh (EUP)
            mean = jnp.mean(y, axis=0, keepdims=True)                   # batch stats (XLU)
            var = jnp.mean((y - mean) ** 2, axis=0, keepdims=True)      # biased variance
            x = (y - mean) * jax.lax.rsqrt(var + BN_EPS)                # gamma=1, beta=0
            # Dropout(p=0.0) -> identity

        # Final layer: Linear -> Softplus (beta=1, threshold=20)
        w = param_refs[-2][...]
        b = param_refs[-1][...]
        y = jnp.dot(x, w, preferred_element_type=jnp.float32) + b
        y = jnp.where(
            y > SOFTPLUS_THRESHOLD,
            y,
            jnp.log1p(jnp.exp(jnp.minimum(y, SOFTPLUS_THRESHOLD))),
        )
        o_ref[...] = y.astype(o_ref.dtype)

    return kernel


def _build_forward(num_linear, out_dim):
    """One jitted forward that calls a single fused pallas_call (all weights in VMEM)."""
    kernel = _make_fused_kernel(num_linear)
    num_inputs = 1 + 2 * num_linear  # x + (w, b) per linear layer

    @jax.jit
    def forward(x, *flat_params):
        n = x.shape[0]
        return pl.pallas_call(
            kernel,
            out_shape=jax.ShapeDtypeStruct((n, out_dim), jnp.float32),
            in_specs=[pl.BlockSpec(memory_space=pltpu.MemorySpace.VMEM)] * num_inputs,
            out_specs=pl.BlockSpec(memory_space=pltpu.MemorySpace.VMEM),
        )(x, *flat_params)

    return forward


class DNNPallas:
    """JAX/Pallas equivalent of the PyTorch DNN(layers) module (forward pass only)."""

    def __init__(self, layers, key):
        self.layers = list(layers)
        num_linear = len(layers) - 1
        params = []
        for i in range(num_linear):
            key, sub = jax.random.split(key)
            fan_in, fan_out = layers[i], layers[i + 1]
            # nn.init.xavier_normal_(gain=1.0): std = sqrt(2 / (fan_in + fan_out))
            std = (2.0 / (fan_in + fan_out)) ** 0.5
            w = jax.random.normal(sub, (fan_out, fan_in), dtype=jnp.float32) * std
            b = jnp.zeros((1, fan_out), dtype=jnp.float32)  # nn.init.zeros_
            # store weight pre-transposed to (in, out) for the kernel
            params.append((jnp.asarray(w.T), b))
        self.params = params
        # flatten (w0, b0, w1, b1, ...) once; total weight bytes are tiny (~KBs)
        self._flat_params = tuple(p for pair in params for p in pair)
        self._forward = _build_forward(num_linear, layers[-1])

    def __call__(self, x):
        x = jnp.asarray(x, jnp.float32)
        return self._forward(x, *self._flat_params)


if __name__ == "__main__":
    key = jax.random.PRNGKey(0)
    key, xkey, pkey = jax.random.split(key, 3)

    # Typical PINN layer spec, kept small: 2 inputs (e.g. (x, t)), 3 hidden layers, 1 output
    layers = [2, 32, 32, 32, 1]
    batch = 8

    model = DNNPallas(layers, pkey)
    x = jax.random.normal(xkey, (batch, layers[0]), dtype=jnp.float32)

    out = model(x)
    out = jax.block_until_ready(out)

    assert out.shape == (batch, layers[-1])
    assert bool(jnp.all(jnp.isfinite(out)))
    assert bool(jnp.all(out > 0.0))  # softplus output is strictly positive

    # run again to confirm the jitted path (no retrace) also works
    out2 = jax.block_until_ready(model(x))
    assert bool(jnp.allclose(out, out2))

    print("KERNEL_OK")
</pallas_src>

<mosaic_0001>
module attributes {stable_mosaic.version = 11 : i64} {
  func.func @kernel(%arg0: memref<8x2xf32, #tpu.memory_space<vmem>>, %arg1: memref<2x32xf32, #tpu.memory_space<vmem>>, %arg2: memref<1x32xf32, #tpu.memory_space<vmem>>, %arg3: memref<32x32xf32, #tpu.memory_space<vmem>>, %arg4: memref<1x32xf32, #tpu.memory_space<vmem>>, %arg5: memref<32x32xf32, #tpu.memory_space<vmem>>, %arg6: memref<1x32xf32, #tpu.memory_space<vmem>>, %arg7: memref<32x1xf32, #tpu.memory_space<vmem>>, %arg8: memref<1x1xf32, #tpu.memory_space<vmem>>, %arg9: memref<8x1xf32, #tpu.memory_space<vmem>>) attributes {dimension_semantics = [], scalar_prefetch = 0 : i64, scratch_operands = 0 : i64, tpu.core_type = #tpu.core_type<tc>} {
    %c0 = arith.constant 0 : index
    %c0_0 = arith.constant 0 : index
    %0 = vector.load %arg0[%c0, %c0_0] : memref<8x2xf32, #tpu.memory_space<vmem>>, vector<8x2xf32>
    %c0_1 = arith.constant 0 : index
    %c0_2 = arith.constant 0 : index
    %1 = vector.load %arg1[%c0_1, %c0_2] : memref<2x32xf32, #tpu.memory_space<vmem>>, vector<2x32xf32>
    %c0_3 = arith.constant 0 : index
    %c0_4 = arith.constant 0 : index
    %2 = vector.load %arg2[%c0_3, %c0_4] : memref<1x32xf32, #tpu.memory_space<vmem>>, vector<1x32xf32>
    %cst = arith.constant dense<0.000000e+00> : vector<8x32xf32>
    %3 = tpu.matmul %0, %1, %cst {dimension_numbers = #tpu.dot_dimension_numbers<[1], [0], [0], [1], [0, 0, 1, 1], [], []>} : vector<8x2xf32>, vector<2x32xf32>, vector<8x32xf32> -> vector<8x32xf32>
    %4 = vector.broadcast %2 : vector<1x32xf32> to vector<8x32xf32>
    %5 = arith.addf %3, %4 : vector<8x32xf32>
    %6 = math.tanh %5 : vector<8x32xf32>
    %cst_5 = arith.constant dense<0.000000e+00> : vector<32xf32>
    %7 = vector.multi_reduction <add>, %6, %cst_5 [0] : vector<8x32xf32> to vector<32xf32>
    %8 = vector.shape_cast %7 : vector<32xf32> to vector<1x32xf32>
    %cst_6 = arith.constant 8.000000e+00 : f32
    %9 = vector.broadcast %cst_6 : f32 to vector<1x32xf32>
    %10 = arith.divf %8, %9 : vector<1x32xf32>
    %11 = vector.broadcast %10 : vector<1x32xf32> to vector<8x32xf32>
    %12 = arith.subf %6, %11 : vector<8x32xf32>
    %13 = arith.mulf %12, %12 : vector<8x32xf32>
    %cst_7 = arith.constant dense<0.000000e+00> : vector<32xf32>
    %14 = vector.multi_reduction <add>, %13, %cst_7 [0] : vector<8x32xf32> to vector<32xf32>
    %15 = vector.shape_cast %14 : vector<32xf32> to vector<1x32xf32>
    %cst_8 = arith.constant 8.000000e+00 : f32
    %16 = vector.broadcast %cst_8 : f32 to vector<1x32xf32>
    %17 = arith.divf %15, %16 : vector<1x32xf32>
    %18 = vector.broadcast %10 : vector<1x32xf32> to vector<8x32xf32>
    %19 = arith.subf %6, %18 : vector<8x32xf32>
    %cst_9 = arith.constant 9.99999974E-6 : f32
    %20 = vector.broadcast %cst_9 : f32 to vector<1x32xf32>
    %21 = arith.addf %17, %20 : vector<1x32xf32>
    %22 = math.rsqrt %21 : vector<1x32xf32>
    %23 = vector.broadcast %22 : vector<1x32xf32> to vector<8x32xf32>
    %24 = arith.mulf %19, %23 : vector<8x32xf32>
    %c0_10 = arith.constant 0 : index
    %c0_11 = arith.constant 0 : index
    %25 = vector.load %arg3[%c0_10, %c0_11] : memref<32x32xf32, #tpu.memory_space<vmem>>, vector<32x32xf32>
    %c0_12 = arith.constant 0 : index
    %c0_13 = arith.constant 0 : index
    %26 = vector.load %arg4[%c0_12, %c0_13] : memref<1x32xf32, #tpu.memory_space<vmem>>, vector<1x32xf32>
    %cst_14 = arith.constant dense<0.000000e+00> : vector<8x32xf32>
    %27 = tpu.matmul %24, %25, %cst_14 {dimension_numbers = #tpu.dot_dimension_numbers<[1], [0], [0], [1], [0, 0, 1, 1], [], []>} : vector<8x32xf32>, vector<32x32xf32>, vector<8x32xf32> -> vector<8x32xf32>
    %28 = vector.broadcast %26 : vector<1x32xf32> to vector<8x32xf32>
    %29 = arith.addf %27, %28 : vector<8x32xf32>
    %30 = math.tanh %29 : vector<8x32xf32>
    %cst_15 = arith.constant dense<0.000000e+00> : vector<32xf32>
    %31 = vector.multi_reduction <add>, %30, %cst_15 [0] : vector<8x32xf32> to vector<32xf32>
    %32 = vector.shape_cast %31 : vector<32xf32> to vector<1x32xf32>
    %cst_16 = arith.constant 8.000000e+00 : f32
    %33 = vector.broadcast %cst_16 : f32 to vector<1x32xf32>
    %34 = arith.divf %32, %33 : vector<1x32xf32>
    %35 = vector.broadcast %34 : vector<1x32xf32> to vector<8x32xf32>
    %36 = arith.subf %30, %35 : vector<8x32xf32>
    %37 = arith.mulf %36, %36 : vector<8x32xf32>
    %cst_17 = arith.constant dense<0.000000e+00> : vector<32xf32>
    %38 = vector.multi_reduction <add>, %37, %cst_17 [0] : vector<8x32xf32> to vector<32xf32>
    %39 = vector.shape_cast %38 : vector<32xf32> to vector<1x32xf32>
    %cst_18 = arith.constant 8.000000e+00 : f32
    %40 = vector.broadcast %cst_18 : f32 to vector<1x32xf32>
    %41 = arith.divf %39, %40 : vector<1x32xf32>
    %42 = vector.broadcast %34 : vector<1x32xf32> to vector<8x32xf32>
    %43 = arith.subf %30, %42 : vector<8x32xf32>
    %cst_19 = arith.constant 9.99999974E-6 : f32
    %44 = vector.broadcast %cst_19 : f32 to vector<1x32xf32>
    %45 = arith.addf %41, %44 : vector<1x32xf32>
    %46 = math.rsqrt %45 : vector<1x32xf32>
    %47 = vector.broadcast %46 : vector<1x32xf32> to vector<8x32xf32>
    %48 = arith.mulf %43, %47 : vector<8x32xf32>
    %c0_20 = arith.constant 0 : index
    %c0_21 = arith.constant 0 : index
    %49 = vector.load %arg5[%c0_20, %c0_21] : memref<32x32xf32, #tpu.memory_space<vmem>>, vector<32x32xf32>
    %c0_22 = arith.constant 0 : index
    %c0_23 = arith.constant 0 : index
    %50 = vector.load %arg6[%c0_22, %c0_23] : memref<1x32xf32, #tpu.memory_space<vmem>>, vector<1x32xf32>
    %cst_24 = arith.constant dense<0.000000e+00> : vector<8x32xf32>
    %51 = tpu.matmul %48, %49, %cst_24 {dimension_numbers = #tpu.dot_dimension_numbers<[1], [0], [0], [1], [0, 0, 1, 1], [], []>} : vector<8x32xf32>, vector<32x32xf32>, vector<8x32xf32> -> vector<8x32xf32>
    %52 = vector.broadcast %50 : vector<1x32xf32> to vector<8x32xf32>
    %53 = arith.addf %51, %52 : vector<8x32xf32>
    %54 = math.tanh %53 : vector<8x32xf32>
    %cst_25 = arith.constant dense<0.000000e+00> : vector<32xf32>
    %55 = vector.multi_reduction <add>, %54, %cst_25 [0] : vector<8x32xf32> to vector<32xf32>
    %56 = vector.shape_cast %55 : vector<32xf32> to vector<1x32xf32>
    %cst_26 = arith.constant 8.000000e+00 : f32
    %57 = vector.broadcast %cst_26 : f32 to vector<1x32xf32>
    %58 = arith.divf %56, %57 : vector<1x32xf32>
    %59 = vector.broadcast %58 : vector<1x32xf32> to vector<8x32xf32>
    %60 = arith.subf %54, %59 : vector<8x32xf32>
    %61 = arith.mulf %60, %60 : vector<8x32xf32>
    %cst_27 = arith.constant dense<0.000000e+00> : vector<32xf32>
    %62 = vector.multi_reduction <add>, %61, %cst_27 [0] : vector<8x32xf32> to vector<32xf32>
    %63 = vector.shape_cast %62 : vector<32xf32> to vector<1x32xf32>
    %cst_28 = arith.constant 8.000000e+00 : f32
    %64 = vector.broadcast %cst_28 : f32 to vector<1x32xf32>
    %65 = arith.divf %63, %64 : vector<1x32xf32>
    %66 = vector.broadcast %58 : vector<1x32xf32> to vector<8x32xf32>
    %67 = arith.subf %54, %66 : vector<8x32xf32>
    %cst_29 = arith.constant 9.99999974E-6 : f32
    %68 = vector.broadcast %cst_29 : f32 to vector<1x32xf32>
    %69 = arith.addf %65, %68 : vector<1x32xf32>
    %70 = math.rsqrt %69 : vector<1x32xf32>
    %71 = vector.broadcast %70 : vector<1x32xf32> to vector<8x32xf32>
    %72 = arith.mulf %67, %71 : vector<8x32xf32>
    %c0_30 = arith.constant 0 : index
    %c0_31 = arith.constant 0 : index
    %73 = vector.load %arg7[%c0_30, %c0_31] : memref<32x1xf32, #tpu.memory_space<vmem>>, vector<32x1xf32>
    %c0_32 = arith.constant 0 : index
    %c0_33 = arith.constant 0 : index
    %74 = vector.load %arg8[%c0_32, %c0_33] : memref<1x1xf32, #tpu.memory_space<vmem>>, vector<1x1xf32>
    %cst_34 = arith.constant dense<0.000000e+00> : vector<8x1xf32>
    %75 = tpu.matmul %72, %73, %cst_34 {dimension_numbers = #tpu.dot_dimension_numbers<[1], [0], [0], [1], [0, 0, 1, 1], [], []>} : vector<8x32xf32>, vector<32x1xf32>, vector<8x1xf32> -> vector<8x1xf32>
    %76 = vector.broadcast %74 : vector<1x1xf32> to vector<8x1xf32>
    %77 = arith.addf %75, %76 : vector<8x1xf32>
    %cst_35 = arith.constant 2.000000e+01 : f32
    %78 = vector.broadcast %cst_35 : f32 to vector<8x1xf32>
    %79 = arith.cmpf ogt, %77, %78 : vector<8x1xf32>
    %cst_36 = arith.constant 2.000000e+01 : f32
    %80 = vector.broadcast %cst_36 : f32 to vector<8x1xf32>
    %81 = arith.minimumf %77, %80 : vector<8x1xf32>
    %82 = math.exp %81 : vector<8x1xf32>
    %83 = math.log1p %82 : vector<8x1xf32>
    %84 = arith.select %79, %77, %83 : vector<8x1xi1>, vector<8x1xf32>
    %c0_37 = arith.constant 0 : index
    %c0_38 = arith.constant 0 : index
    %85 = vector.load %arg9[%c0_37, %c0_38] : memref<8x1xf32, #tpu.memory_space<vmem>>, vector<8x1xf32>
    tpu.vector_store %arg9[%c0_37, %c0_38], %84 {strides = array<i32>} : memref<8x1xf32, #tpu.memory_space<vmem>>, vector<8x1xf32>,
    return
  }
}

</mosaic_0001>

<llo_original>
// kernel: forward.1
$region0: #{forward.1}
  #allocation0 [shape = 'u32[]', space=smem, size = 0x4, offset = 0x4, fixed_abs, tag = 'smem constant byte address 0x4 - core index']
  #allocation1 [shape = 'u32[144,128]{1,0:T(1,128)}', space=vmem, size = 0x12000, scoped, tag = 'internal scratch']
  #allocation2 [shape = 'f32[1,1]{1,0:T(1,128)S(1)}', space=vmem, size = 0x200, scoped, tag = 'scoped memory for forward.1']
  %s0 = inlined_call_operand.vmem [shape: f32[8,2], index: 0, kind: input, shape index: {}]
  %s1 = inlined_call_operand.vmem [shape: f32[2,32], index: 1, kind: input, shape index: {}]
  %s2 = inlined_call_operand.vmem [shape: f32[1,32], index: 2, kind: input, shape index: {}]
  %s3 = inlined_call_operand.vmem [shape: f32[32,32], index: 3, kind: input, shape index: {}]
  %s4 = inlined_call_operand.vmem [shape: f32[1,32], index: 4, kind: input, shape index: {}]
  %s5 = inlined_call_operand.hbm [shape: f32[32,32], index: 5, kind: input, shape index: {}]
  %s6 = inlined_call_operand.vmem [shape: f32[1,32], index: 6, kind: input, shape index: {}]
  %s7 = inlined_call_operand.vmem [shape: f32[32,1], index: 7, kind: input, shape index: {}]
  %s8 = inlined_call_operand.<no memory space> [shape: f32[1,1], index: 8, kind: input, shape index: {}]
  %s9 = inlined_call_operand.vmem [shape: f32[8,1], index: 9, kind: output, shape index: {}]
  %s10 = sld [smem:[#allocation0]]
  $region50: #{forward.1} parent=0
    _
  %s12 = ssub.s32 1, %s10
  %s13 = scalar_select 0, %s12, %s10
  %v14 = vstv %s8
  %15 = vst [vmem:[#allocation2] sm:$0x1] %v14
  $region1: #{forward.1} parent=0
    #allocation3 [shape = 'u8[16384]{0}', space=vmem, size = 0x4000, scoped, tag = 'input window, operand 5, single buffered']
    #allocation4 [shape = 's32[1]{0}', space=sflag, size = 0x4, scoped, tag = 'scoped memory for forward.1']
    %16 = vsyncpa [#allocation4], 0
    // Predicated region
    $region2: #{forward.1} parent=1 // pred_check
      _
    $region3: #{forward.1} parent=1 // pred_check_branch
      %18 = sbr.rel (0) target = $region5
    $region4: #{forward.1} parent=1 // pred_region
      _
    $region5: #{forward.1} parent=1 // pred_fallthru
      _
    // Predicated region
    $region6: #{forward.1} parent=1 // pred_check
      _
    $region7: #{forward.1} parent=1 // pred_check_branch
      %20 = sbr.rel (0) target = $region9
    $region8: #{forward.1} parent=1 // pred_region
      _
    $region9: #{forward.1} parent=1 // pred_fallthru
      _
    // Predicated region
    $region10: #{forward.1} parent=1 // pred_check
      _
    $region11: #{forward.1} parent=1 // pred_check_branch
      %22 = sbr.rel (0) target = $region13
    $region12: #{forward.1} parent=1 // pred_region
      _
    $region13: #{forward.1} parent=1 // pred_fallthru
      _
    // Predicated region
    $region14: #{forward.1} parent=1 // pred_check
      _
    $region15: #{forward.1} parent=1 // pred_check_branch
      %24 = sbr.rel (0) target = $region17
    $region16: #{forward.1} parent=1 // pred_region
      _
    $region17: #{forward.1} parent=1 // pred_fallthru
      _
    // Predicated region
    $region18: #{forward.1} parent=1 // pred_check
      _
    $region19: #{forward.1} parent=1 // pred_check_branch
      %26 = sbr.rel (0) target = $region21
    $region20: #{forward.1} parent=1 // pred_region
      _
    $region21: #{forward.1} parent=1 // pred_fallthru
      _
    // Predicated region
    $region22: #{forward.1} parent=1 // pred_check
      _
    $region23: #{forward.1} parent=1 // pred_check_branch
      %28 = sbr.rel (0) target = $region25
    $region24: #{forward.1} parent=1 // pred_region
      %s30 = ssub.s32 512, 512
      %31 = vsyncadd [#allocation4], %s30
      %s32 = sshll.u32 [#allocation3], 4
      %s33 = int_to_ptr.vmem [resolvable:$true] %s32
      %38 = dma.hbm_to_vmem [thread:$0]  %s5, 512, %s33, [#allocation4], 128, 128, 8
    $region25: #{forward.1} parent=1 // pred_fallthru
      _
    // Predicated region
    $region26: #{forward.1} parent=1 // pred_check
      _
    $region27: #{forward.1} parent=1 // pred_check_branch
      %40 = sbr.rel (0) target = $region29
    $region28: #{forward.1} parent=1 // pred_region
      _
    $region29: #{forward.1} parent=1 // pred_fallthru
      _
    // Predicated region
    $region30: #{forward.1} parent=1 // pred_check
      _
    $region31: #{forward.1} parent=1 // pred_check_branch
      %42 = sbr.rel (0) target = $region33
    $region32: #{forward.1} parent=1 // pred_region
      _
    $region33: #{forward.1} parent=1 // pred_fallthru
      _
    // Predicated region
    $region34: #{forward.1} parent=1 // pred_check
      _
    $region35: #{forward.1} parent=1 // pred_check_branch
      %44 = sbr.rel (0) target = $region37
    $region36: #{forward.1} parent=1 // pred_region
      _
    $region37: #{forward.1} parent=1 // pred_fallthru
      _
    // Predicated region
    $region38: #{forward.1} parent=1 // pred_check
      _
    $region39: #{forward.1} parent=1 // pred_check_branch
      %46 = sbr.rel (0) target = $region41
    $region40: #{forward.1} parent=1 // pred_region
      %47 = dma.done [#allocation4], 512
    $region41: #{forward.1} parent=1 // pred_fallthru
      _
    %v48 = vld [vmem:[%s0] sm:$0xff]
    %v49 = vld [vmem:[%s1] sm:$0x3]
    %v50 = vld [vmem:[%s2] sm:$0x1]
    %v52 = vlaneseq
    %v53 = vshrl.u32 %v52, 7
    %v54 = vsub.s32 0, %v53
    %v55 = vrot.slane %v50, %v54
    %vm57 = vcmask 15360
    %v59 = vsel %vm57, %v48, 0
    %vm61 = vcmask 1041408
    %v63 = vsel %vm61, %v49, 0
    %65 = vmatprep.subr.mxu0 0.0
    %66 = vmatpush1.msra.mxu0 0.0
    %67 = vmatprep.subr.mxu0 0.0
    %68 = vmatpush1.msra.mxu0 0.0
    %69 = vmatprep.subr.mxu0 0.0
    %70 = vmatpush1.msra.mxu0 0.0
    %71 = vmatprep.subr.mxu0 0.0
    %72 = vmatpush1.msra.mxu0 0.0
    %73 = vmatprep.subr.mxu0 0.0
    %74 = vmatpush1.msra.mxu0 0.0
    %75 = vmatprep.subr.mxu0 0.0
    %76 = vmatpush1.msra.mxu0 0.0
    %77 = vmatprep.subr.mxu0 0.0
    %78 = vmatpush1.msra.mxu0 0.0
    %79 = vmatprep.subr.mxu0 0.0
    %80 = vmatpush1.msra.mxu0 0.0
    %81 = vmatprep.subr.mxu0 0.0
    %82 = vmatpush1.msra.mxu0 0.0
    %83 = vmatprep.subr.mxu0 0.0
    %84 = vmatpush1.msra.mxu0 0.0
    %85 = vmatprep.subr.mxu0 0.0
    %86 = vmatpush1.msra.mxu0 0.0
    %87 = vmatprep.subr.mxu0 0.0
    %88 = vmatpush1.msra.mxu0 0.0
    %89 = vmatprep.subr.mxu0 0.0
    %90 = vmatpush1.msra.mxu0 0.0
    %91 = vmatprep.subr.mxu0 0.0
    %92 = vmatpush1.msra.mxu0 0.0
    %93 = vmatprep.subr.mxu0 0.0
    %94 = vmatpush1.msra.mxu0 0.0
    %95 = vmatprep.subr.mxu0 0.0
    %96 = vmatpush1.msra.mxu0 %v63
    %97 = vmatprep.subr.mxu0 0.0
    %98 = vmatpush2.msra.mxu0 0.0
    %99 = vmatprep.subr.mxu0 0.0
    %100 = vmatpush2.msra.mxu0 0.0
    %101 = vmatprep.subr.mxu0 0.0
    %102 = vmatpush2.msra.mxu0 0.0
    %103 = vmatprep.subr.mxu0 0.0
    %104 = vmatpush2.msra.mxu0 0.0
    %105 = vmatprep.subr.mxu0 0.0
    %106 = vmatpush2.msra.mxu0 0.0
    %107 = vmatprep.subr.mxu0 0.0
    %108 = vmatpush2.msra.mxu0 0.0
    %109 = vmatprep.subr.mxu0 0.0
    %110 = vmatpush2.msra.mxu0 0.0
    %111 = vmatprep.subr.mxu0 0.0
    %112 = vmatpush2.msra.mxu0 0.0
    %113 = vmatprep.subr.mxu0 0.0
    %114 = vmatpush2.msra.mxu0 0.0
    %115 = vmatprep.subr.mxu0 0.0
    %116 = vmatpush2.msra.mxu0 0.0
    %117 = vmatprep.subr.mxu0 0.0
    %118 = vmatpush2.msra.mxu0 0.0
    %119 = vmatprep.subr.mxu0 0.0
    %120 = vmatpush2.msra.mxu0 0.0
    %121 = vmatprep.subr.mxu0 0.0
    %122 = vmatpush2.msra.mxu0 0.0
    %123 = vmatprep.subr.mxu0 0.0
    %124 = vmatpush2.msra.mxu0 0.0
    %125 = vmatprep.subr.mxu0 0.0
    %126 = vmatpush2.msra.mxu0 0.0
    %127 = vmatprep.subr.mxu0 0.0
    %128 = vmatpush2.msra.mxu0 0.0
    %129 = vmatprep.mubr.f32.mxu0 0.0
    %130 = vmatmul.mubr.f32.gmra.mxu0 %v59
    %v131 = vpop.f32.mrf.mxu0
    %v132 = vadd.f32 %v55, %v131
    %v133 = vpop.f32.mrf.mxu0
    %134 = vdwg.mxu0
    %v135 = vtanh.pop %v132
    %vm136 = vcmask 261120
    %v137 = vsel %vm136, %v135, 0.0
    %v138 = vrot.slane %v137, 4
    %v139 = vadd.f32 %v137, %v138
    %v140 = vrot.slane %v139, 2
    %v141 = vadd.f32 %v139, %v140
    %v142 = vrot.slane %v141, 1
    %v143 = vadd.f32 %v141, %v142
    %v144 = vrcp.pop 8.0
    %v145 = vmul.f32 %v143, %v144
    %v146 = vsub.f32 %v135, %v145
    %v147 = vmul.f32 %v146, %v146
    %v148 = vsel %vm136, %v147, 0.0
    %v149 = vrot.slane %v148, 4
    %v150 = vadd.f32 %v148, %v149
    %v151 = vrot.slane %v150, 2
    %v152 = vadd.f32 %v150, %v151
    %v153 = vrot.slane %v152, 1
    %v154 = vadd.f32 %v152, %v153
    %v155 = vmul.f32 %v154, %v144
    %v156 = vadd.f32 %v155, 1e-05
    %v157 = vrsqrt.pop %v156
    %v158 = vmul.f32 %v146, %v157
    %v159 = vld [vmem:[%s3] sm:$0xff]
    %v160 = vld [vmem:[%s3 + $0x8] sm:$0xff]
    %v161 = vld [vmem:[%s3 + $0x10] sm:$0xff]
    %v162 = vld [vmem:[%s3 + $0x18] sm:$0xff]
    %v163 = vld [vmem:[%s4] sm:$0x1]
    %v165 = vlaneseq
    %v166 = vshrl.u32 %v165, 7
    %v167 = vsub.s32 0, %v166
    %v168 = vrot.slane %v163, %v167
    %v171 = vsel %vm136, %v158, 0
    %173 = vmatprep.subr.mxu0 0.0
    %174 = vmatpush1.msra.mxu0 0.0
    %175 = vmatprep.subr.mxu0 0.0
    %176 = vmatpush1.msra.mxu0 0.0
    %177 = vmatprep.subr.mxu0 0.0
    %178 = vmatpush1.msra.mxu0 0.0
    %179 = vmatprep.subr.mxu0 0.0
    %180 = vmatpush1.msra.mxu0 0.0
    %181 = vmatprep.subr.mxu0 0.0
    %182 = vmatpush1.msra.mxu0 0.0
    %183 = vmatprep.subr.mxu0 0.0
    %184 = vmatpush1.msra.mxu0 0.0
    %185 = vmatprep.subr.mxu0 0.0
    %186 = vmatpush1.msra.mxu0 0.0
    %187 = vmatprep.subr.mxu0 0.0
    %188 = vmatpush1.msra.mxu0 0.0
    %189 = vmatprep.subr.mxu0 0.0
    %190 = vmatpush1.msra.mxu0 0.0
    %191 = vmatprep.subr.mxu0 0.0
    %192 = vmatpush1.msra.mxu0 0.0
    %193 = vmatprep.subr.mxu0 0.0
    %194 = vmatpush1.msra.mxu0 0.0
    %195 = vmatprep.subr.mxu0 0.0
    %196 = vmatpush1.msra.mxu0 0.0
    %197 = vmatprep.subr.mxu0 0.0
    %198 = vmatpush1.msra.mxu0 %v162
    %199 = vmatprep.subr.mxu0 0.0
    %200 = vmatpush1.msra.mxu0 %v161
    %201 = vmatprep.subr.mxu0 0.0
    %202 = vmatpush1.msra.mxu0 %v160
    %203 = vmatprep.subr.mxu0 0.0
    %204 = vmatpush1.msra.mxu0 %v159
    %205 = vmatprep.subr.mxu0 0.0
    %206 = vmatpush2.msra.mxu0 0.0
    %207 = vmatprep.subr.mxu0 0.0
    %208 = vmatpush2.msra.mxu0 0.0
    %209 = vmatprep.subr.mxu0 0.0
    %210 = vmatpush2.msra.mxu0 0.0
    %211 = vmatprep.subr.mxu0 0.0
    %212 = vmatpush2.msra.mxu0 0.0
    %213 = vmatprep.subr.mxu0 0.0
    %214 = vmatpush2.msra.mxu0 0.0
    %215 = vmatprep.subr.mxu0 0.0
    %216 = vmatpush2.msra.mxu0 0.0
    %217 = vmatprep.subr.mxu0 0.0
    %218 = vmatpush2.msra.mxu0 0.0
    %219 = vmatprep.subr.mxu0 0.0
    %220 = vmatpush2.msra.mxu0 0.0
    %221 = vmatprep.subr.mxu0 0.0
    %222 = vmatpush2.msra.mxu0 0.0
    %223 = vmatprep.subr.mxu0 0.0
    %224 = vmatpush2.msra.mxu0 0.0
    %225 = vmatprep.subr.mxu0 0.0
    %226 = vmatpush2.msra.mxu0 0.0
    %227 = vmatprep.subr.mxu0 0.0
    %228 = vmatpush2.msra.mxu0 0.0
    %229 = vmatprep.subr.mxu0 0.0
    %230 = vmatpush2.msra.mxu0 0.0
    %231 = vmatprep.subr.mxu0 0.0
    %232 = vmatpush2.msra.mxu0 0.0
    %233 = vmatprep.subr.mxu0 0.0
    %234 = vmatpush2.msra.mxu0 0.0
    %235 = vmatprep.subr.mxu0 0.0
    %236 = vmatpush2.msra.mxu0 0.0
    %237 = vmatprep.mubr.f32.mxu0 0.0
    %238 = vmatmul.mubr.f32.gmra.mxu0 %v171
    %v239 = vpop.f32.mrf.mxu0
    %v240 = vadd.f32 %v168, %v239
    %v241 = vpop.f32.mrf.mxu0
    %242 = vdwg.mxu0
    %v243 = vtanh.pop %v240
    %v244 = vsel %vm136, %v243, 0.0
    %v245 = vrot.slane %v244, 4
    %v246 = vadd.f32 %v244, %v245
    %v247 = vrot.slane %v246, 2
    %v248 = vadd.f32 %v246, %v247
    %v249 = vrot.slane %v248, 1
    %v250 = vadd.f32 %v248, %v249
    %v251 = vmul.f32 %v250, %v144
    %v252 = vsub.f32 %v243, %v251
    %v253 = vmul.f32 %v252, %v252
    %v254 = vsel %vm136, %v253, 0.0
    %v255 = vrot.slane %v254, 4
    %v256 = vadd.f32 %v254, %v255
    %v257 = vrot.slane %v256, 2
    %v258 = vadd.f32 %v256, %v257
    %v259 = vrot.slane %v258, 1
    %v260 = vadd.f32 %v258, %v259
    %v261 = vmul.f32 %v260, %v144
    %v262 = vadd.f32 %v261, 1e-05
    %v263 = vrsqrt.pop %v262
    %v264 = vmul.f32 %v252, %v263
    %v265 = vld [vmem:[#allocation3] sm:$0xff]
    %v266 = vld [vmem:[#allocation3 + $0x8] sm:$0xff]
    %v267 = vld [vmem:[#allocation3 + $0x10] sm:$0xff]
    %v268 = vld [vmem:[#allocation3 + $0x18] sm:$0xff]
    %v269 = vld [vmem:[%s6] sm:$0x1]
    %v271 = vlaneseq
    %v272 = vshrl.u32 %v271, 7
    %v273 = vsub.s32 0, %v272
    %v274 = vrot.slane %v269, %v273
    %v277 = vsel %vm136, %v264, 0
    %279 = vmatprep.subr.mxu0 0.0
    %280 = vmatpush1.msra.mxu0 0.0
    %281 = vmatprep.subr.mxu0 0.0
    %282 = vmatpush1.msra.mxu0 0.0
    %283 = vmatprep.subr.mxu0 0.0
    %284 = vmatpush1.msra.mxu0 0.0
    %285 = vmatprep.subr.mxu0 0.0
    %286 = vmatpush1.msra.mxu0 0.0
    %287 = vmatprep.subr.mxu0 0.0
    %288 = vmatpush1.msra.mxu0 0.0
    %289 = vmatprep.subr.mxu0 0.0
    %290 = vmatpush1.msra.mxu0 0.0
    %291 = vmatprep.subr.mxu0 0.0
    %292 = vmatpush1.msra.mxu0 0.0
    %293 = vmatprep.subr.mxu0 0.0
    %294 = vmatpush1.msra.mxu0 0.0
    %295 = vmatprep.subr.mxu0 0.0
    %296 = vmatpush1.msra.mxu0 0.0
    %297 = vmatprep.subr.mxu0 0.0
    %298 = vmatpush1.msra.mxu0 0.0
    %299 = vmatprep.subr.mxu0 0.0
    %300 = vmatpush1.msra.mxu0 0.0
    %301 = vmatprep.subr.mxu0 0.0
    %302 = vmatpush1.msra.mxu0 0.0
    %303 = vmatprep.subr.mxu0 0.0
    %304 = vmatpush1.msra.mxu0 %v268
    %305 = vmatprep.subr.mxu0 0.0
    %306 = vmatpush1.msra.mxu0 %v267
    %307 = vmatprep.subr.mxu0 0.0
    %308 = vmatpush1.msra.mxu0 %v266
    %309 = vmatprep.subr.mxu0 0.0
    %310 = vmatpush1.msra.mxu0 %v265
    %311 = vmatprep.subr.mxu0 0.0
    %312 = vmatpush2.msra.mxu0 0.0
    %313 = vmatprep.subr.mxu0 0.0
    %314 = vmatpush2.msra.mxu0 0.0
    %315 = vmatprep.subr.mxu0 0.0
    %316 = vmatpush2.msra.mxu0 0.0
    %317 = vmatprep.subr.mxu0 0.0
    %318 = vmatpush2.msra.mxu0 0.0
    %319 = vmatprep.subr.mxu0 0.0
    %320 = vmatpush2.msra.mxu0 0.0
    %321 = vmatprep.subr.mxu0 0.0
    %322 = vmatpush2.msra.mxu0 0.0
    %323 = vmatprep.subr.mxu0 0.0
    %324 = vmatpush2.msra.mxu0 0.0
    %325 = vmatprep.subr.mxu0 0.0
    %326 = vmatpush2.msra.mxu0 0.0
    %327 = vmatprep.subr.mxu0 0.0
    %328 = vmatpush2.msra.mxu0 0.0
    %329 = vmatprep.subr.mxu0 0.0
    %330 = vmatpush2.msra.mxu0 0.0
    %331 = vmatprep.subr.mxu0 0.0
    %332 = vmatpush2.msra.mxu0 0.0
    %333 = vmatprep.subr.mxu0 0.0
    %334 = vmatpush2.msra.mxu0 0.0
    %335 = vmatprep.subr.mxu0 0.0
    %336 = vmatpush2.msra.mxu0 0.0
    %337 = vmatprep.subr.mxu0 0.0
    %338 = vmatpush2.msra.mxu0 0.0
    %339 = vmatprep.subr.mxu0 0.0
    %340 = vmatpush2.msra.mxu0 0.0
    %341 = vmatprep.subr.mxu0 0.0
    %342 = vmatpush2.msra.mxu0 0.0
    %343 = vmatprep.mubr.f32.mxu0 0.0
    %344 = vmatmul.mubr.f32.gmra.mxu0 %v277
    %v345 = vpop.f32.mrf.mxu0
    %v346 = vadd.f32 %v274, %v345
    %v347 = vpop.f32.mrf.mxu0
    %348 = vdwg.mxu0
    %v349 = vtanh.pop %v346
    %v350 = vsel %vm136, %v349, 0.0
    %v351 = vrot.slane %v350, 4
    %v352 = vadd.f32 %v350, %v351
    %v353 = vrot.slane %v352, 2
    %v354 = vadd.f32 %v352, %v353
    %v355 = vrot.slane %v354, 1
    %v356 = vadd.f32 %v354, %v355
    %v357 = vmul.f32 %v356, %v144
    %v358 = vsub.f32 %v349, %v357
    %v359 = vmul.f32 %v358, %v358
    %v360 = vsel %vm136, %v359, 0.0
    %v361 = vrot.slane %v360, 4
    %v362 = vadd.f32 %v360, %v361
    %v363 = vrot.slane %v362, 2
    %v364 = vadd.f32 %v362, %v363
    %v365 = vrot.slane %v364, 1
    %v366 = vadd.f32 %v364, %v365
    %v367 = vmul.f32 %v366, %v144
    %v368 = vadd.f32 %v367, 1e-05
    %v369 = vrsqrt.pop %v368
    %v370 = vmul.f32 %v358, %v369
    %v371 = vld [vmem:[%s7] sm:$0xff]
    %v372 = vld [vmem:[%s7 + $0x8] sm:$0xff]
    %v373 = vld [vmem:[%s7 + $0x10] sm:$0xff]
    %v374 = vld [vmem:[%s7 + $0x18] sm:$0xff]
    %v375 = vld [vmem:[#allocation2] sm:$0x1]
    %v377 = vlaneseq
    %v378 = vshrl.u32 %v377, 7
    %v379 = vsub.s32 0, %v378
    %v380 = vrot.slane %v375, %v379
    %v383 = vsel %vm136, %v370, 0
    %385 = vmatprep.subr.mxu0 0.0
    %386 = vmatpush1.msra.mxu0 0.0
    %387 = vmatprep.subr.mxu0 0.0
    %388 = vmatpush1.msra.mxu0 0.0
    %389 = vmatprep.subr.mxu0 0.0
    %390 = vmatpush1.msra.mxu0 0.0
    %391 = vmatprep.subr.mxu0 0.0
    %392 = vmatpush1.msra.mxu0 0.0
    %393 = vmatprep.subr.mxu0 0.0
    %394 = vmatpush1.msra.mxu0 0.0
    %395 = vmatprep.subr.mxu0 0.0
    %396 = vmatpush1.msra.mxu0 0.0
    %397 = vmatprep.subr.mxu0 0.0
    %398 = vmatpush1.msra.mxu0 0.0
    %399 = vmatprep.subr.mxu0 0.0
    %400 = vmatpush1.msra.mxu0 0.0
    %401 = vmatprep.subr.mxu0 0.0
    %402 = vmatpush1.msra.mxu0 0.0
    %403 = vmatprep.subr.mxu0 0.0
    %404 = vmatpush1.msra.mxu0 0.0
    %405 = vmatprep.subr.mxu0 0.0
    %406 = vmatpush1.msra.mxu0 0.0
    %407 = vmatprep.subr.mxu0 0.0
    %408 = vmatpush1.msra.mxu0 0.0
    %409 = vmatprep.subr.mxu0 0.0
    %410 = vmatpush1.msra.mxu0 %v374
    %411 = vmatprep.subr.mxu0 0.0
    %412 = vmatpush1.msra.mxu0 %v373
    %413 = vmatprep.subr.mxu0 0.0
    %414 = vmatpush1.msra.mxu0 %v372
    %415 = vmatprep.subr.mxu0 0.0
    %416 = vmatpush1.msra.mxu0 %v371
    %417 = vmatprep.subr.mxu0 0.0
    %418 = vmatpush2.msra.mxu0 0.0
    %419 = vmatprep.subr.mxu0 0.0
    %420 = vmatpush2.msra.mxu0 0.0
    %421 = vmatprep.subr.mxu0 0.0
    %422 = vmatpush2.msra.mxu0 0.0
    %423 = vmatprep.subr.mxu0 0.0
    %424 = vmatpush2.msra.mxu0 0.0
    %425 = vmatprep.subr.mxu0 0.0
    %426 = vmatpush2.msra.mxu0 0.0
    %427 = vmatprep.subr.mxu0 0.0
    %428 = vmatpush2.msra.mxu0 0.0
    %429 = vmatprep.subr.mxu0 0.0
    %430 = vmatpush2.msra.mxu0 0.0
    %431 = vmatprep.subr.mxu0 0.0
    %432 = vmatpush2.msra.mxu0 0.0
    %433 = vmatprep.subr.mxu0 0.0
    %434 = vmatpush2.msra.mxu0 0.0
    %435 = vmatprep.subr.mxu0 0.0
    %436 = vmatpush2.msra.mxu0 0.0
    %437 = vmatprep.subr.mxu0 0.0
    %438 = vmatpush2.msra.mxu0 0.0
    %439 = vmatprep.subr.mxu0 0.0
    %440 = vmatpush2.msra.mxu0 0.0
    %441 = vmatprep.subr.mxu0 0.0
    %442 = vmatpush2.msra.mxu0 0.0
    %443 = vmatprep.subr.mxu0 0.0
    %444 = vmatpush2.msra.mxu0 0.0
    %445 = vmatprep.subr.mxu0 0.0
    %446 = vmatpush2.msra.mxu0 0.0
    %447 = vmatprep.subr.mxu0 0.0
    %448 = vmatpush2.msra.mxu0 0.0
    %449 = vmatprep.mubr.f32.mxu0 0.0
    %450 = vmatmul.mubr.f32.gmra.mxu0 %v383
    %v451 = vpop.f32.mrf.mxu0
    %v452 = vadd.f32 %v380, %v451
    %v453 = vpop.f32.mrf.mxu0
    %454 = vdwg.mxu0
    %vm455 = vcmp.gt.f32.partialorder %v452, 20.0
    %v456 = vmin.f32 %v452, 20.0
    %v457 = vmul.f32 %v456, 1.442695
    %v458 = vpow.pop %v457
    %v459 = vadd.f32 %v458, 1.0
    %v460 = vlog2.pop %v459
    %v461 = vmul.f32 %v460, 0.6931472
    %v462 = vmul.f32 -0.5, %v458
    %v463 = vadd.f32 %v462, 1.0
    %v464 = vmul.f32 %v463, %v458
    %v465 = vand.u32 2147483647, %v458
    %vm466 = vcmp.lt.f32.partialorder %v465, 0.0004427343
    %v467 = vsel %vm466, %v464, %v461
    %v468 = vsel %vm455, %v452, %v467
    %vm469 = vcmask 7168
    %470 = vst.msk [vmem:[%s9] sm:$0xff] %vm469, %v468
    // Predicated region
    $region42: #{forward.1} parent=1 // pred_check
      _
    $region43: #{forward.1} parent=1 // pred_check_branch
      %472 = sbr.rel (0) target = $region45
    $region44: #{forward.1} parent=1 // pred_region
      _
    $region45: #{forward.1} parent=1 // pred_fallthru
      _
    // Predicated region
    $region46: #{forward.1} parent=1 // pred_check
      _
    $region47: #{forward.1} parent=1 // pred_check_branch
      %474 = sbr.rel (0) target = $region49
    $region48: #{forward.1} parent=1 // pred_region
      _
    $region49: #{forward.1} parent=1 // pred_fallthru
      _
    %475 = vsyncpa [#allocation4], 1

</llo_original>
